<compile_context>
chip_gen: v5e
topology: v5e:2x2
jax: 0.10.0
libtpu: 0.0.40
codegen_flags: <defaults>
</compile_context>

<pallas_src>
import functools

import jax
import jax.numpy as jnp
from jax import lax
from jax.experimental import pallas as pl
from jax.experimental.pallas import tpu as pltpu

EPS = 1e-5  # nn.BatchNorm2d default


def _round_up(a: int, b: int) -> int:
    return (a + b - 1) // b * b


def _stats_kernel(p_ref, w_ref, stats_ref):
    # p_ref: [tm, K] bf16, w_ref: [K, Np] bf16, stats_ref: [1, 2, Np] f32.
    y = jnp.dot(p_ref[...], w_ref[...], preferred_element_type=jnp.float32)
    stats_ref[0, 0:1, :] = jnp.sum(y, axis=0, keepdims=True)
    stats_ref[0, 1:2, :] = jnp.sum(y * y, axis=0, keepdims=True)


def _apply_kernel(p_ref, w_ref, scale_ref, shift_ref, o_ref):
    # Recompute the tile matmul and apply the folded BN scale/shift (one FMA).
    y = jnp.dot(p_ref[...], w_ref[...], preferred_element_type=jnp.float32)
    o_ref[...] = (y * scale_ref[...] + shift_ref[...]).astype(o_ref.dtype)


def patch_merging_forward(x, conv_w, conv_b, bn_gamma, bn_beta, *, tile_m=512):
    """x: [B, C, H, W] (NCHW). conv_w: [O, C, 2, 2]. Returns [B, O, H//2, W//2]."""
    del conv_b  # Training-mode BN subtracts the batch mean, which exactly
    #             cancels the per-channel conv bias -> dead work, dropped.
    B, C, H, W = x.shape
    O = conv_w.shape[0]
    Ho, Wo = H // 2, W // 2
    M, K, N = B * Ho * Wo, C * 4, O
    Np = _round_up(N, 128)                       # lane-dense out channels
    tm = min(tile_m, _round_up(M, 16))
    Mp = _round_up(M, tm)
    n_tiles = Mp // tm

    # --- wrapper glue: im2col (forced by the NCHW API), bf16 inputs. ---
    xr = x.reshape(B, C, Ho, 2, Wo, 2)
    patches = xr.transpose(0, 2, 4, 1, 3, 5).reshape(M, K)   # K = (c, kh, kw)
    if Mp > M:
        patches = jnp.pad(patches, ((0, Mp - M), (0, 0)))    # zero rows
    patches = patches.astype(jnp.bfloat16)

    w_flat = conv_w.reshape(O, K).T                          # [K, N]
    w_flat = jnp.pad(w_flat, ((0, 0), (0, Np - N))).astype(jnp.bfloat16)
    g_pad = jnp.pad(bn_gamma.astype(jnp.float32), (0, Np - N))
    be_pad = jnp.pad(bn_beta.astype(jnp.float32), (0, Np - N))

    parallel = pltpu.CompilerParams(dimension_semantics=("parallel",))

    # --- pass 1: per-tile partial sum / sum-of-squares per channel. ---
    partials = pl.pallas_call(
        _stats_kernel,
        out_shape=jax.ShapeDtypeStruct((n_tiles, 2, Np), jnp.float32),
        grid=(n_tiles,),
        in_specs=[
            pl.BlockSpec((tm, K), lambda i: (i, 0)),
            pl.BlockSpec((K, Np), lambda i: (0, 0)),
        ],
        out_specs=pl.BlockSpec((1, 2, Np), lambda i: (i, 0, 0)),
        compiler_params=parallel,
    )(patches, w_flat)

    # --- tiny glue: fold BN into one per-channel scale/shift.
    # Zero-padded rows of `patches` contribute nothing (bias is dropped), so
    # divide by the true M. Zero-padded channels give scale = shift = 0.
    totals = jnp.sum(partials, axis=0)                       # [2, Np]
    mean = totals[0] / M
    var = jnp.maximum(totals[1] / M - mean * mean, 0.0)      # biased batch var
    inv = lax.rsqrt(var + EPS)
    scale = (g_pad * inv).reshape(1, Np)
    shift = (be_pad - mean * g_pad * inv).reshape(1, Np)

    # --- pass 2: recompute tile matmul, apply fused scale/shift. ---
    out_flat = pl.pallas_call(
        _apply_kernel,
        out_shape=jax.ShapeDtypeStruct((Mp, Np), jnp.float32),
        grid=(n_tiles,),
        in_specs=[
            pl.BlockSpec((tm, K), lambda i: (i, 0)),
            pl.BlockSpec((K, Np), lambda i: (0, 0)),
            pl.BlockSpec((1, Np), lambda i: (0, 0)),
            pl.BlockSpec((1, Np), lambda i: (0, 0)),
        ],
        out_specs=pl.BlockSpec((tm, Np), lambda i: (i, 0)),
        compiler_params=parallel,
    )(patches, w_flat, scale, shift)

    # --- wrapper glue: slice off padding, back to NCHW. ---
    out = out_flat[:M, :N].reshape(B, Ho, Wo, N)
    return out.transpose(0, 3, 1, 2)


def _reference(x, conv_w, conv_b, bn_gamma, bn_beta):
    # Same math as the PyTorch module (Conv2d k=2,s=2 + training-mode
    # BatchNorm2d), with inputs rounded to bf16 to mirror the kernel's
    # documented bf16-input / f32-accumulate precision choice.
    xb = x.astype(jnp.bfloat16).astype(jnp.float32)
    wb = conv_w.astype(jnp.bfloat16).astype(jnp.float32)
    y = lax.conv_general_dilated(
        xb, wb, window_strides=(2, 2), padding="VALID",
        dimension_numbers=("NCHW", "OIHW", "NCHW"))
    y = y + conv_b.reshape(1, -1, 1, 1)   # kernel drops it; BN cancels it
    mean = jnp.mean(y, axis=(0, 2, 3), keepdims=True)
    var = jnp.mean((y - mean) ** 2, axis=(0, 2, 3), keepdims=True)
    y = (y - mean) * lax.rsqrt(var + EPS)
    return y * bn_gamma.reshape(1, -1, 1, 1) + bn_beta.reshape(1, -1, 1, 1)


if __name__ == "__main__":
    key = jax.random.PRNGKey(0)
    k_x, k_w, k_b, k_g, k_be = jax.random.split(key, 5)

    B, C_in, H, W = 2, 4, 16, 16
    C_out = 8

    x = jax.random.normal(k_x, (B, C_in, H, W), dtype=jnp.float32)

    # Deterministic parameter init (Conv2d: [O, I, 2, 2]; BN affine: [O]).
    fan_in = C_in * 2 * 2
    bound = 1.0 / (fan_in ** 0.5)
    conv_w = jax.random.uniform(k_w, (C_out, C_in, 2, 2), jnp.float32, -bound, bound)
    conv_b = jax.random.uniform(k_b, (C_out,), jnp.float32, -bound, bound)
    bn_gamma = 1.0 + 0.1 * jax.random.normal(k_g, (C_out,), jnp.float32)
    bn_beta = 0.1 * jax.random.normal(k_be, (C_out,), jnp.float32)

    # tile_m=64 so the small demo still exercises the multi-tile pipeline
    # (M = 128 -> 2 grid steps).
    fwd = jax.jit(functools.partial(patch_merging_forward, tile_m=64))
    out = fwd(x, conv_w, conv_b, bn_gamma, bn_beta)
    out = jax.block_until_ready(out)

    ref = _reference(x, conv_w, conv_b, bn_gamma, bn_beta)
    assert out.shape == (B, C_out, H // 2, W // 2), out.shape
    err = float(jnp.max(jnp.abs(out - ref)))
    assert jnp.allclose(out, ref, atol=2e-3, rtol=2e-3), err

    print("KERNEL_OK")
</pallas_src>

<mosaic_0001>
module attributes {stable_mosaic.version = 11 : i64} {
  func.func @_stats_kernel(%arg0: i32, %arg1: memref<64x16xbf16, #tpu.memory_space<vmem>>, %arg2: memref<16x128xbf16, #tpu.memory_space<vmem>>, %arg3: memref<1x2x128xf32, #tpu.memory_space<vmem>>) attributes {dimension_semantics = [#tpu.dimension_semantics<parallel>], iteration_bounds = array<i64: 2>, scalar_prefetch = 0 : i64, scratch_operands = 0 : i64, tpu.core_type = #tpu.core_type<tc>, window_params = [{transform_indices = @transform_0, window_bounds = array<i64: 64, 16>}, {pipeline_mode = #tpu.pipeline_mode<synchronous>, transform_indices = @transform_1, window_bounds = array<i64: 16, 128>}, {transform_indices = @transform_2, window_bounds = array<i64: 1, 2, 128>}]} {
    %c0 = arith.constant 0 : index
    %c0_0 = arith.constant 0 : index
    %0 = vector.load %arg1[%c0, %c0_0] : memref<64x16xbf16, #tpu.memory_space<vmem>>, vector<64x16xbf16>
    %c0_1 = arith.constant 0 : index
    %c0_2 = arith.constant 0 : index
    %1 = vector.load %arg2[%c0_1, %c0_2] : memref<16x128xbf16, #tpu.memory_space<vmem>>, vector<16x128xbf16>
    %cst = arith.constant dense<0.000000e+00> : vector<64x128xf32>
    %2 = tpu.matmul %0, %1, %cst {dimension_numbers = #tpu.dot_dimension_numbers<[1], [0], [0], [1], [0, 0, 1, 1], [], []>} : vector<64x16xbf16>, vector<16x128xbf16>, vector<64x128xf32> -> vector<64x128xf32>
    %cst_3 = arith.constant dense<0.000000e+00> : vector<128xf32>
    %3 = vector.multi_reduction <add>, %2, %cst_3 [0] : vector<64x128xf32> to vector<128xf32>
    %4 = vector.shape_cast %3 : vector<128xf32> to vector<1x128xf32>
    %c0_4 = arith.constant 0 : index
    %c0_5 = arith.constant 0 : index
    %c0_6 = arith.constant 0 : index
    %5 = vector.load %arg3[%c0_4, %c0_5, %c0_6] : memref<1x2x128xf32, #tpu.memory_space<vmem>>, vector<1x1x128xf32>
    %6 = vector.shape_cast %5 : vector<1x1x128xf32> to vector<1x128xf32>
    %7 = vector.shape_cast %4 : vector<1x128xf32> to vector<1x1x128xf32>
    tpu.vector_store %arg3[%c0_4, %c0_5, %c0_6], %7 {strides = array<i32>} : memref<1x2x128xf32, #tpu.memory_space<vmem>>, vector<1x1x128xf32>,
    %8 = arith.mulf %2, %2 : vector<64x128xf32>
    %cst_7 = arith.constant dense<0.000000e+00> : vector<128xf32>
    %9 = vector.multi_reduction <add>, %8, %cst_7 [0] : vector<64x128xf32> to vector<128xf32>
    %10 = vector.shape_cast %9 : vector<128xf32> to vector<1x128xf32>
    %c0_8 = arith.constant 0 : index
    %c1 = arith.constant 1 : index
    %c0_9 = arith.constant 0 : index
    %11 = vector.load %arg3[%c0_8, %c1, %c0_9] : memref<1x2x128xf32, #tpu.memory_space<vmem>>, vector<1x1x128xf32>
    %12 = vector.shape_cast %11 : vector<1x1x128xf32> to vector<1x128xf32>
    %13 = vector.shape_cast %10 : vector<1x128xf32> to vector<1x1x128xf32>
    tpu.vector_store %arg3[%c0_8, %c1, %c0_9], %13 {strides = array<i32>} : memref<1x2x128xf32, #tpu.memory_space<vmem>>, vector<1x1x128xf32>,
    return
  }
  func.func @transform_0(%arg0: i32) -> (i32, i32) {
    %c0_i32 = arith.constant 0 : i32
    %c0_i32_0 = arith.constant 0 : i32
    return %arg0, %c0_i32 : i32, i32
  }
  func.func @transform_1(%arg0: i32) -> (i32, i32) {
    %c0_i32 = arith.constant 0 : i32
    %c0_i32_0 = arith.constant 0 : i32
    %c0_i32_1 = arith.constant 0 : i32
    return %c0_i32, %c0_i32_0 : i32, i32
  }
  func.func @transform_2(%arg0: i32) -> (i32, i32, i32) {
    %c0_i32 = arith.constant 0 : i32
    %c0_i32_0 = arith.constant 0 : i32
    %c0_i32_1 = arith.constant 0 : i32
    return %arg0, %c0_i32, %c0_i32_0 : i32, i32, i32
  }
}

module attributes {stable_mosaic.version = 11 : i64} {
  func.func @_apply_kernel(%arg0: i32, %arg1: memref<64x16xbf16, #tpu.memory_space<vmem>>, %arg2: memref<16x128xbf16, #tpu.memory_space<vmem>>, %arg3: memref<1x128xf32, #tpu.memory_space<vmem>>, %arg4: memref<1x128xf32, #tpu.memory_space<vmem>>, %arg5: memref<64x128xf32, #tpu.memory_space<vmem>>) attributes {dimension_semantics = [#tpu.dimension_semantics<parallel>], iteration_bounds = array<i64: 2>, scalar_prefetch = 0 : i64, scratch_operands = 0 : i64, tpu.core_type = #tpu.core_type<tc>, window_params = [{transform_indices = @transform_0, window_bounds = array<i64: 64, 16>}, {pipeline_mode = #tpu.pipeline_mode<synchronous>, transform_indices = @transform_1, window_bounds = array<i64: 16, 128>}, {pipeline_mode = #tpu.pipeline_mode<synchronous>, transform_indices = @transform_2, window_bounds = array<i64: 1, 128>}, {pipeline_mode = #tpu.pipeline_mode<synchronous>, transform_indices = @transform_3, window_bounds = array<i64: 1, 128>}, {transform_indices = @transform_4, window_bounds = array<i64: 64, 128>}]} {
    %c0 = arith.constant 0 : index
    %c0_0 = arith.constant 0 : index
    %0 = vector.load %arg1[%c0, %c0_0] : memref<64x16xbf16, #tpu.memory_space<vmem>>, vector<64x16xbf16>
    %c0_1 = arith.constant 0 : index
    %c0_2 = arith.constant 0 : index
    %1 = vector.load %arg2[%c0_1, %c0_2] : memref<16x128xbf16, #tpu.memory_space<vmem>>, vector<16x128xbf16>
    %cst = arith.constant dense<0.000000e+00> : vector<64x128xf32>
    %2 = tpu.matmul %0, %1, %cst {dimension_numbers = #tpu.dot_dimension_numbers<[1], [0], [0], [1], [0, 0, 1, 1], [], []>} : vector<64x16xbf16>, vector<16x128xbf16>, vector<64x128xf32> -> vector<64x128xf32>
    %c0_3 = arith.constant 0 : index
    %c0_4 = arith.constant 0 : index
    %3 = vector.load %arg3[%c0_3, %c0_4] : memref<1x128xf32, #tpu.memory_space<vmem>>, vector<1x128xf32>
    %4 = vector.broadcast %3 : vector<1x128xf32> to vector<64x128xf32>
    %5 = arith.mulf %2, %4 : vector<64x128xf32>
    %c0_5 = arith.constant 0 : index
    %c0_6 = arith.constant 0 : index
    %6 = vector.load %arg4[%c0_5, %c0_6] : memref<1x128xf32, #tpu.memory_space<vmem>>, vector<1x128xf32>
    %7 = vector.broadcast %6 : vector<1x128xf32> to vector<64x128xf32>
    %8 = arith.addf %5, %7 : vector<64x128xf32>
    %c0_7 = arith.constant 0 : index
    %c0_8 = arith.constant 0 : index
    %9 = vector.load %arg5[%c0_7, %c0_8] : memref<64x128xf32, #tpu.memory_space<vmem>>, vector<64x128xf32>
    tpu.vector_store %arg5[%c0_7, %c0_8], %8 {strides = array<i32>} : memref<64x128xf32, #tpu.memory_space<vmem>>, vector<64x128xf32>,
    return
  }
  func.func @transform_0(%arg0: i32) -> (i32, i32) {
    %c0_i32 = arith.constant 0 : i32
    %c0_i32_0 = arith.constant 0 : i32
    return %arg0, %c0_i32 : i32, i32
  }
  func.func @transform_1(%arg0: i32) -> (i32, i32) {
    %c0_i32 = arith.constant 0 : i32
    %c0_i32_0 = arith.constant 0 : i32
    %c0_i32_1 = arith.constant 0 : i32
    return %c0_i32, %c0_i32_0 : i32, i32
  }
  func.func @transform_2(%arg0: i32) -> (i32, i32) {
    %c0_i32 = arith.constant 0 : i32
    %c0_i32_0 = arith.constant 0 : i32
    %c0_i32_1 = arith.constant 0 : i32
    return %c0_i32, %c0_i32_0 : i32, i32
  }
  func.func @transform_3(%arg0: i32) -> (i32, i32) {
    %c0_i32 = arith.constant 0 : i32
    %c0_i32_0 = arith.constant 0 : i32
    %c0_i32_1 = arith.constant 0 : i32
    return %c0_i32, %c0_i32_0 : i32, i32
  }
  func.func @transform_4(%arg0: i32) -> (i32, i32) {
    %c0_i32 = arith.constant 0 : i32
    %c0_i32_0 = arith.constant 0 : i32
    return %arg0, %c0_i32 : i32, i32
  }
}

</mosaic_0001>

<llo_original>
// kernel: patch_merging_forward.3
$region0: #{patch_merging_forward.3}
  #allocation0 [shape = 'u32[]', space=smem, size = 0x4, offset = 0x4, fixed_abs, tag = 'smem constant byte address 0x4 - core index']
  #allocation1 [shape = 'u32[72,128]{1,0:T(1,128)}', space=vmem, size = 0x9000, scoped, tag = 'internal scratch']
  %s0 = inlined_call_operand.vmem [shape: bf16[128,16], index: 0, kind: input, shape index: {}]
  %s1 = inlined_call_operand.vmem [shape: bf16[16,128], index: 1, kind: input, shape index: {}]
  %s2 = inlined_call_operand.vmem [shape: f32[1,128], index: 2, kind: input, shape index: {}]
  %s3 = inlined_call_operand.vmem [shape: f32[1,128], index: 3, kind: input, shape index: {}]
  %s4 = inlined_call_operand.vmem [shape: f32[128,128], index: 4, kind: output, shape index: {}]
  %s5 = sld [smem:[#allocation0]]
  $region49: #{patch_merging_forward.3} parent=0
    _
  %s7 = ssub.s32 1, %s5
  %s8 = scalar_select 0, %s7, %s5
  loop: start=0, step=1, limit=4
  $region2: #{patch_merging_forward.3} parent=0 // loop_pre_header
    _
  $region3: #{patch_merging_forward.3} parent=0 // loop_header
    %s10 = sphi 0, %s14
    %p11 = scmp.ge.s32.totalorder %s10, 4
    %s20 = sphi 0, %s22
    %s23 = sphi 0, %s20
    %s24 = sphi 0, %s23
    %s40 = sphi 0, %s24
    %s44 = sphi 0, %s44
    %s46 = sphi 0, %s44
    %s47 = sphi 0, %s46
    %s61 = sphi 0, %s47
    %s65 = sphi 0, %s65
    %s67 = sphi 0, %s65
    %s68 = sphi 0, %s67
    %s82 = sphi 0, %s68
    %s86 = sphi 0, %s86
    %s88 = sphi 0, %s86
    %s89 = sphi 0, %s88
    %s103 = sphi 0, %s89
    %s109 = sphi 0, %s111
    %s112 = sphi 0, %s109
    %s113 = sphi 0, %s112
    %s129 = sphi 0, %s113
  $region4: #{patch_merging_forward.3} parent=0 // loop_header_branch
    %13 = sbr.rel (%p11) target = $region8
  $region5: #{patch_merging_forward.3} parent=0 // loop_body
    %s15 = ssub.s32 %s10, 1
    %s16 = ssub.s32 %s10, 2
    %s17 = sadd.s32 %s10, 1
    %s18 = ssub.s32 %s10, %s17
    %p19 = scmp.eq.s32.totalorder %s18, 0
    %s21 = sadd.s32 %s20, 1
    %s22 = scalar_select %p19, %s20, %s21
    %p25 = pneg %p19
    %p26 = scmp.eq.s32.totalorder %s10, 1
    %p27 = por %p25, %p26
    %p28 = scmp.ne.s32.totalorder %s20, %s23
    %p29 = scmp.eq.s32.totalorder %s10, 0
    %p30 = por %p28, %p29
    %p31 = scmp.ne.s32.totalorder %s20, %s23
    %p32 = scmp.eq.s32.totalorder %s15, 1
    %p33 = por %p31, %p32
    %p34 = scmp.ne.s32.totalorder %s23, %s24
    %p35 = scmp.eq.s32.totalorder %s15, 0
    %p36 = por %p34, %p35
    %p37 = scmp.ne.s32.totalorder %s23, %s24
    %p38 = scmp.eq.s32.totalorder %s16, 1
    %p39 = por %p37, %p38
    %p41 = scmp.ne.s32.totalorder %s24, %s40
    %p42 = scmp.eq.s32.totalorder %s16, 0
    %p43 = por %p41, %p42
    %s45 = sadd.s32 %s44, 1
    %p48 = scmp.eq.s32.totalorder %s10, 1
    %p49 = scmp.ne.s32.totalorder %s44, %s46
    %p50 = scmp.eq.s32.totalorder %s10, 0
    %p51 = por %p49, %p50
    %p52 = scmp.ne.s32.totalorder %s44, %s46
    %p53 = scmp.eq.s32.totalorder %s15, 1
    %p54 = por %p52, %p53
    %p55 = scmp.ne.s32.totalorder %s46, %s47
    %p56 = scmp.eq.s32.totalorder %s15, 0
    %p57 = por %p55, %p56
    %p58 = scmp.ne.s32.totalorder %s46, %s47
    %p59 = scmp.eq.s32.totalorder %s16, 1
    %p60 = por %p58, %p59
    %p62 = scmp.ne.s32.totalorder %s47, %s61
    %p63 = scmp.eq.s32.totalorder %s16, 0
    %p64 = por %p62, %p63
    %s66 = sadd.s32 %s65, 1
    %p69 = scmp.eq.s32.totalorder %s10, 1
    %p70 = scmp.ne.s32.totalorder %s65, %s67
    %p71 = scmp.eq.s32.totalorder %s10, 0
    %p72 = por %p70, %p71
    %p73 = scmp.ne.s32.totalorder %s65, %s67
    %p74 = scmp.eq.s32.totalorder %s15, 1
    %p75 = por %p73, %p74
    %p76 = scmp.ne.s32.totalorder %s67, %s68
    %p77 = scmp.eq.s32.totalorder %s15, 0
    %p78 = por %p76, %p77
    %p79 = scmp.ne.s32.totalorder %s67, %s68
    %p80 = scmp.eq.s32.totalorder %s16, 1
    %p81 = por %p79, %p80
    %p83 = scmp.ne.s32.totalorder %s68, %s82
    %p84 = scmp.eq.s32.totalorder %s16, 0
    %p85 = por %p83, %p84
    %s87 = sadd.s32 %s86, 1
    %p90 = scmp.eq.s32.totalorder %s10, 1
    %p91 = scmp.ne.s32.totalorder %s86, %s88
    %p92 = scmp.eq.s32.totalorder %s10, 0
    %p93 = por %p91, %p92
    %p94 = scmp.ne.s32.totalorder %s86, %s88
    %p95 = scmp.eq.s32.totalorder %s15, 1
    %p96 = por %p94, %p95
    %p97 = scmp.ne.s32.totalorder %s88, %s89
    %p98 = scmp.eq.s32.totalorder %s15, 0
    %p99 = por %p97, %p98
    %p100 = scmp.ne.s32.totalorder %s88, %s89
    %p101 = scmp.eq.s32.totalorder %s16, 1
    %p102 = por %p100, %p101
    %p104 = scmp.ne.s32.totalorder %s89, %s103
    %p105 = scmp.eq.s32.totalorder %s16, 0
    %p106 = por %p104, %p105
    %s107 = ssub.s32 %s10, %s17
    %p108 = scmp.eq.s32.totalorder %s107, 0
    %s110 = sadd.s32 %s109, 1
    %s111 = scalar_select %p108, %s109, %s110
    %p114 = pneg %p108
    %p115 = scmp.eq.s32.totalorder %s10, 1
    %p116 = por %p114, %p115
    %p117 = scmp.ne.s32.totalorder %s109, %s112
    %p118 = scmp.eq.s32.totalorder %s10, 0
    %p119 = por %p117, %p118
    %p120 = scmp.ne.s32.totalorder %s109, %s112
    %p121 = scmp.eq.s32.totalorder %s15, 1
    %p122 = por %p120, %p121
    %p123 = scmp.ne.s32.totalorder %s112, %s113
    %p124 = scmp.eq.s32.totalorder %s15, 0
    %p125 = por %p123, %p124
    %p126 = scmp.ne.s32.totalorder %s112, %s113
    %p127 = scmp.eq.s32.totalorder %s16, 1
    %p128 = por %p126, %p127
    %p130 = scmp.ne.s32.totalorder %s113, %s129
    %p131 = scmp.eq.s32.totalorder %s16, 0
    %p132 = por %p130, %p131
    %p133 = scmp.le.s32.totalorder 1, %s10
    %p134 = scmp.lt.s32.totalorder %s10, 3
    %p135 = pnand %p133, %p134
    %p136 = pneg %p135
    // Predicated region
    $region9: #{patch_merging_forward.3} parent=5 // pred_check
      _
    $region10: #{patch_merging_forward.3} parent=5 // pred_check_branch
      %138 = sbr.rel (%p135) target = $region12
    $region11: #{patch_merging_forward.3} parent=5 // pred_region
      %s139 = ssub.s32 %s10, 1
      // Predicated region
      $region13: #{patch_merging_forward.3} parent=11 // pred_check
        %p140 = pneg %p57
      $region14: #{patch_merging_forward.3} parent=11 // pred_check_branch
        %142 = sbr.rel (%p140) target = $region16
      $region15: #{patch_merging_forward.3} parent=11 // pred_region
        _
      $region16: #{patch_merging_forward.3} parent=11 // pred_fallthru
        _
      // Predicated region
      $region17: #{patch_merging_forward.3} parent=11 // pred_check
        %p143 = pneg %p78
      $region18: #{patch_merging_forward.3} parent=11 // pred_check_branch
        %145 = sbr.rel (%p143) target = $region20
      $region19: #{patch_merging_forward.3} parent=11 // pred_region
        _
      $region20: #{patch_merging_forward.3} parent=11 // pred_fallthru
        _
      // Predicated region
      $region21: #{patch_merging_forward.3} parent=11 // pred_check
        %p146 = pneg %p99
      $region22: #{patch_merging_forward.3} parent=11 // pred_check_branch
        %148 = sbr.rel (%p146) target = $region24
      $region23: #{patch_merging_forward.3} parent=11 // pred_region
        _
      $region24: #{patch_merging_forward.3} parent=11 // pred_fallthru
        _
    $region12: #{patch_merging_forward.3} parent=5 // pred_fallthru
      _
    %p149 = scmp.lt.s32.totalorder %s10, 2
    // Predicated region
    $region25: #{patch_merging_forward.3} parent=5 // pred_check
      %p150 = pneg %p149
    $region26: #{patch_merging_forward.3} parent=5 // pred_check_branch
      %152 = sbr.rel (%p150) target = $region28
    $region27: #{patch_merging_forward.3} parent=5 // pred_region
      // Predicated region
      $region29: #{patch_merging_forward.3} parent=27 // pred_check
        %p153 = pneg %p30
      $region30: #{patch_merging_forward.3} parent=27 // pred_check_branch
        %155 = sbr.rel (%p153) target = $region32
      $region31: #{patch_merging_forward.3} parent=27 // pred_region
        %s156 = smul.u32 8, %s10
        %p157 = scmp.lt.s32.totalorder %s156, 15
        %s158 = scalar_select %p157, %s156, 15
        %s159 = smul.addr %s158, 4
        %s160 = scalar_lea.vmem %s0, %s159
        %s161 = smul.u32 8, %s10
      $region32: #{patch_merging_forward.3} parent=27 // pred_fallthru
        _
    $region28: #{patch_merging_forward.3} parent=5 // pred_fallthru
      _
    %p162 = scmp.le.s32.totalorder 1, %s10
    %p163 = scmp.lt.s32.totalorder %s10, 3
    %p164 = pnand %p162, %p163
    %p165 = pneg %p164
    // Predicated region
    $region33: #{patch_merging_forward.3} parent=5 // pred_check
      _
    $region34: #{patch_merging_forward.3} parent=5 // pred_check_branch
      %167 = sbr.rel (%p164) target = $region36
    $region35: #{patch_merging_forward.3} parent=5 // pred_region
      %s168 = ssub.s32 %s10, 1
      %s169 = smul.u32 8, %s15
      %p170 = scmp.lt.s32.totalorder %s169, 15
      %s171 = scalar_select %p170, %s169, 15
      %s172 = smul.addr %s171, 4
      %s173 = scalar_lea.vmem %s0, %s172
      %p174 = pneg %p36
      %p175 = pneg %p33
      %p176 = pneg %p57
      %p177 = pneg %p54
      %p178 = pneg %p78
      %p179 = pneg %p75
      %p180 = pneg %p99
      %p181 = pneg %p96
      %p182 = pneg %p125
      %p183 = pneg %p122
      %s184 = smul.u32 8, %s15
      %p185 = scmp.lt.s32.totalorder %s184, 15
      %s186 = scalar_select %p185, %s184, 15
      %s187 = smul.addr %s186, 8
      %s188 = scalar_lea.vmem %s4, %s187
      %s189 = smul.u32 8, %s15
      %p190 = scmp.lt.s32.totalorder %s189, 15
      %s191 = scalar_select %p190, %s189, 15
      %s192 = smul.addr %s191, 4
      %s193 = scalar_lea.vmem %s0, %s192
      %s194 = smul.u32 8, %s15
      %s195 = smul.u32 8, %s15
      %p196 = scmp.lt.s32.totalorder %s195, 15
      %s197 = scalar_select %p196, %s195, 15
      %s198 = smul.addr %s197, 8
      %s199 = scalar_lea.vmem %s4, %s198
      %s200 = smul.u32 8, %s15
      %v202 = vld [vmem:[%s193] sm:$0xf]
      %v203 = vld [vmem:[%s193 + $0x4] sm:$0xf]
      %v204 = vld [vmem:[%s193 + $0x8] sm:$0xf]
      %v205 = vld [vmem:[%s193 + $0xc] sm:$0xf]
      %v206 = vld [vmem:[%s193 + $0x10] sm:$0xf]
      %v207 = vld [vmem:[%s193 + $0x14] sm:$0xf]
      %v208 = vld [vmem:[%s193 + $0x18] sm:$0xf]
      %v209 = vld [vmem:[%s193 + $0x1c] sm:$0xf]
      %v210 = vld [vmem:[%s1] sm:$0xf]
      %v211 = vld [vmem:[%s1 + $0x4] sm:$0xf]
      %v220 = vunpack.c.l.b16 %v202
      %v221 = vunpack.c.l.b16 %v203
      %v222 = vunpack.c.l.b16 %v204
      %v223 = vunpack.c.l.b16 %v205
      %v224 = vunpack.c.l.b16 %v206
      %v225 = vunpack.c.l.b16 %v207
      %v226 = vunpack.c.l.b16 %v208
      %v227 = vunpack.c.l.b16 %v209
      %v228 = vpack.c.b16 %v221, %v220
      %v229 = vpack.c.b16 %v223, %v222
      %v230 = vpack.c.b16 %v225, %v224
      %v231 = vpack.c.b16 %v227, %v226
      %v234 = vunpack.c.l.b16 %v210
      %v235 = vunpack.c.l.b16 %v211
      %v236 = vpack.c.b16 %v235, %v234
      %vm238 = vcmask 130048
      %v240 = vsel %vm238, %v228, 0
      %v243 = vsel %vm238, %v229, 0
      %v246 = vsel %vm238, %v230, 0
      %v249 = vsel %vm238, %v231, 0
      %251 = vmatpush.bf16.msra.mxu0 0
      %252 = vmatpush.bf16.msra.mxu0 0
      %253 = vmatpush.bf16.msra.mxu0 0
      %254 = vmatpush.bf16.msra.mxu0 0
      %255 = vmatpush.bf16.msra.mxu0 0
      %256 = vmatpush.bf16.msra.mxu0 0
      %257 = vmatpush.bf16.msra.mxu0 0
      %258 = vmatpush.bf16.msra.mxu0 %v236
      %259 = vmatmul.bf16.gmra.mxu0 %v240
      %v260 = vpop.f32.mrf.mxu0
      %v261 = vadd.f32 0.0, %v260
      %v262 = vpop.f32.mrf.mxu0
      %v263 = vadd.f32 0.0, %v262
      %264 = vmatmul.bf16.gmra.mxu0 %v243
      %v265 = vpop.f32.mrf.mxu0
      %v266 = vadd.f32 0.0, %v265
      %v267 = vpop.f32.mrf.mxu0
      %v268 = vadd.f32 0.0, %v267
      %269 = vmatmul.bf16.gmra.mxu0 %v246
      %v270 = vpop.f32.mrf.mxu0
      %v271 = vadd.f32 0.0, %v270
      %v272 = vpop.f32.mrf.mxu0
      %v273 = vadd.f32 0.0, %v272
      %274 = vmatmul.bf16.gmra.mxu0 %v249
      %v275 = vpop.f32.mrf.mxu0
      %v276 = vadd.f32 0.0, %v275
      %v277 = vpop.f32.mrf.mxu0
      %v278 = vadd.f32 0.0, %v277
      %279 = vdwg.mxu0
      %v280 = vld [vmem:[%s2] sm:$0x1]
      %v282 = vperm.slane %v280, 0
      %v284 = vmul.f32 %v261, %v282
      %v285 = vmul.f32 %v263, %v282
      %v286 = vmul.f32 %v266, %v282
      %v287 = vmul.f32 %v268, %v282
      %v288 = vmul.f32 %v271, %v282
      %v289 = vmul.f32 %v273, %v282
      %v290 = vmul.f32 %v276, %v282
      %v291 = vmul.f32 %v278, %v282
      %v292 = vld [vmem:[%s3] sm:$0x1]
      %v294 = vperm.slane %v292, 0
      %v296 = vadd.f32 %v284, %v294
      %v297 = vadd.f32 %v285, %v294
      %v298 = vadd.f32 %v286, %v294
      %v299 = vadd.f32 %v287, %v294
      %v300 = vadd.f32 %v288, %v294
      %v301 = vadd.f32 %v289, %v294
      %v302 = vadd.f32 %v290, %v294
      %v303 = vadd.f32 %v291, %v294
      %304 = vst [vmem:[%s199] sm:$0xff] %v296
      %305 = vst [vmem:[%s199 + $0x8] sm:$0xff] %v297
      %306 = vst [vmem:[%s199 + $0x10] sm:$0xff] %v298
      %307 = vst [vmem:[%s199 + $0x18] sm:$0xff] %v299
      %308 = vst [vmem:[%s199 + $0x20] sm:$0xff] %v300
      %309 = vst [vmem:[%s199 + $0x28] sm:$0xff] %v301
      %310 = vst [vmem:[%s199 + $0x30] sm:$0xff] %v302
      %311 = vst [vmem:[%s199 + $0x38] sm:$0xff] %v303
      %s312 = smul.u32 8, %s15
      %p313 = scmp.lt.s32.totalorder %s312, 15
      %s314 = scalar_select %p313, %s312, 15
      %s315 = smul.addr %s314, 8
      %s316 = scalar_lea.vmem %s4, %s315
      // Predicated region
      $region37: #{patch_merging_forward.3} parent=35 // pred_check
        %p317 = pneg %p122
      $region38: #{patch_merging_forward.3} parent=35 // pred_check_branch
        %319 = sbr.rel (%p317) target = $region40
      $region39: #{patch_merging_forward.3} parent=35 // pred_region
        %s320 = smul.u32 8, %s15
      $region40: #{patch_merging_forward.3} parent=35 // pred_fallthru
        _
    $region36: #{patch_merging_forward.3} parent=5 // pred_fallthru
      _
    %p321 = scmp.le.s32.totalorder 2, %s10
    // Predicated region
    $region41: #{patch_merging_forward.3} parent=5 // pred_check
      %p322 = pneg %p321
    $region42: #{patch_merging_forward.3} parent=5 // pred_check_branch
      %324 = sbr.rel (%p322) target = $region44
    $region43: #{patch_merging_forward.3} parent=5 // pred_region
      %s325 = ssub.s32 %s10, 2
      // Predicated region
      $region45: #{patch_merging_forward.3} parent=43 // pred_check
        %p326 = pneg %p128
      $region46: #{patch_merging_forward.3} parent=43 // pred_check_branch
        %328 = sbr.rel (%p326) target = $region48
      $region47: #{patch_merging_forward.3} parent=43 // pred_region
        %s329 = smul.u32 8, %s16
        %p330 = scmp.lt.s32.totalorder %s329, 15
        %s331 = scalar_select %p330, %s329, 15
        %s332 = smul.addr %s331, 8
        %s333 = scalar_lea.vmem %s4, %s332
      $region48: #{patch_merging_forward.3} parent=43 // pred_fallthru
        _
    $region44: #{patch_merging_forward.3} parent=5 // pred_fallthru
      _
  $region6: #{patch_merging_forward.3} parent=0 // loop_footer
    %s14 = sadd.s32 1, %s10
  $region7: #{patch_merging_forward.3} parent=0 // loop_footer_branch
    %9 = sbr.rel target = $region3
  $region8: #{patch_merging_forward.3} parent=0 // loop_exit
    _

// kernel: patch_merging_forward.2
$region0: #{patch_merging_forward.2}
  #allocation0 [shape = 'u32[]', space=smem, size = 0x4, offset = 0x4, fixed_abs, tag = 'smem constant byte address 0x4 - core index']
  #allocation1 [shape = 'u32[72,128]{1,0:T(1,128)}', space=vmem, size = 0x9000, scoped, tag = 'internal scratch']
  %s0 = inlined_call_operand.vmem [shape: bf16[128,16], index: 0, kind: input, shape index: {}]
  %s1 = inlined_call_operand.vmem [shape: bf16[16,128], index: 1, kind: input, shape index: {}]
  %s2 = inlined_call_operand.vmem [shape: f32[2,2,128], index: 2, kind: output, shape index: {}]
  %s3 = sld [smem:[#allocation0]]
  $region41: #{patch_merging_forward.2} parent=0
    _
  %s5 = ssub.s32 1, %s3
  %s6 = scalar_select 0, %s5, %s3
  loop: start=0, step=1, limit=4
  $region2: #{patch_merging_forward.2} parent=0 // loop_pre_header
    _
  $region3: #{patch_merging_forward.2} parent=0 // loop_header
    %s8 = sphi 0, %s12
    %p9 = scmp.ge.s32.totalorder %s8, 4
    %s18 = sphi 0, %s20
    %s21 = sphi 0, %s18
    %s22 = sphi 0, %s21
    %s38 = sphi 0, %s22
    %s42 = sphi 0, %s42
    %s44 = sphi 0, %s42
    %s45 = sphi 0, %s44
    %s59 = sphi 0, %s45
    %s65 = sphi 0, %s67
    %s68 = sphi 0, %s65
    %s69 = sphi 0, %s68
    %s85 = sphi 0, %s69
  $region4: #{patch_merging_forward.2} parent=0 // loop_header_branch
    %11 = sbr.rel (%p9) target = $region8
  $region5: #{patch_merging_forward.2} parent=0 // loop_body
    %s13 = ssub.s32 %s8, 1
    %s14 = ssub.s32 %s8, 2
    %s15 = sadd.s32 %s8, 1
    %s16 = ssub.s32 %s8, %s15
    %p17 = scmp.eq.s32.totalorder %s16, 0
    %s19 = sadd.s32 %s18, 1
    %s20 = scalar_select %p17, %s18, %s19
    %p23 = pneg %p17
    %p24 = scmp.eq.s32.totalorder %s8, 1
    %p25 = por %p23, %p24
    %p26 = scmp.ne.s32.totalorder %s18, %s21
    %p27 = scmp.eq.s32.totalorder %s8, 0
    %p28 = por %p26, %p27
    %p29 = scmp.ne.s32.totalorder %s18, %s21
    %p30 = scmp.eq.s32.totalorder %s13, 1
    %p31 = por %p29, %p30
    %p32 = scmp.ne.s32.totalorder %s21, %s22
    %p33 = scmp.eq.s32.totalorder %s13, 0
    %p34 = por %p32, %p33
    %p35 = scmp.ne.s32.totalorder %s21, %s22
    %p36 = scmp.eq.s32.totalorder %s14, 1
    %p37 = por %p35, %p36
    %p39 = scmp.ne.s32.totalorder %s22, %s38
    %p40 = scmp.eq.s32.totalorder %s14, 0
    %p41 = por %p39, %p40
    %s43 = sadd.s32 %s42, 1
    %p46 = scmp.eq.s32.totalorder %s8, 1
    %p47 = scmp.ne.s32.totalorder %s42, %s44
    %p48 = scmp.eq.s32.totalorder %s8, 0
    %p49 = por %p47, %p48
    %p50 = scmp.ne.s32.totalorder %s42, %s44
    %p51 = scmp.eq.s32.totalorder %s13, 1
    %p52 = por %p50, %p51
    %p53 = scmp.ne.s32.totalorder %s44, %s45
    %p54 = scmp.eq.s32.totalorder %s13, 0
    %p55 = por %p53, %p54
    %p56 = scmp.ne.s32.totalorder %s44, %s45
    %p57 = scmp.eq.s32.totalorder %s14, 1
    %p58 = por %p56, %p57
    %p60 = scmp.ne.s32.totalorder %s45, %s59
    %p61 = scmp.eq.s32.totalorder %s14, 0
    %p62 = por %p60, %p61
    %s63 = ssub.s32 %s8, %s15
    %p64 = scmp.eq.s32.totalorder %s63, 0
    %s66 = sadd.s32 %s65, 1
    %s67 = scalar_select %p64, %s65, %s66
    %p70 = pneg %p64
    %p71 = scmp.eq.s32.totalorder %s8, 1
    %p72 = por %p70, %p71
    %p73 = scmp.ne.s32.totalorder %s65, %s68
    %p74 = scmp.eq.s32.totalorder %s8, 0
    %p75 = por %p73, %p74
    %p76 = scmp.ne.s32.totalorder %s65, %s68
    %p77 = scmp.eq.s32.totalorder %s13, 1
    %p78 = por %p76, %p77
    %p79 = scmp.ne.s32.totalorder %s68, %s69
    %p80 = scmp.eq.s32.totalorder %s13, 0
    %p81 = por %p79, %p80
    %p82 = scmp.ne.s32.totalorder %s68, %s69
    %p83 = scmp.eq.s32.totalorder %s14, 1
    %p84 = por %p82, %p83
    %p86 = scmp.ne.s32.totalorder %s69, %s85
    %p87 = scmp.eq.s32.totalorder %s14, 0
    %p88 = por %p86, %p87
    %p89 = scmp.le.s32.totalorder 1, %s8
    %p90 = scmp.lt.s32.totalorder %s8, 3
    %p91 = pnand %p89, %p90
    %p92 = pneg %p91
    // Predicated region
    $region9: #{patch_merging_forward.2} parent=5 // pred_check
      _
    $region10: #{patch_merging_forward.2} parent=5 // pred_check_branch
      %94 = sbr.rel (%p91) target = $region12
    $region11: #{patch_merging_forward.2} parent=5 // pred_region
      %s95 = ssub.s32 %s8, 1
      // Predicated region
      $region13: #{patch_merging_forward.2} parent=11 // pred_check
        %p96 = pneg %p55
      $region14: #{patch_merging_forward.2} parent=11 // pred_check_branch
        %98 = sbr.rel (%p96) target = $region16
      $region15: #{patch_merging_forward.2} parent=11 // pred_region
        _
      $region16: #{patch_merging_forward.2} parent=11 // pred_fallthru
        _
    $region12: #{patch_merging_forward.2} parent=5 // pred_fallthru
      _
    %p99 = scmp.lt.s32.totalorder %s8, 2
    // Predicated region
    $region17: #{patch_merging_forward.2} parent=5 // pred_check
      %p100 = pneg %p99
    $region18: #{patch_merging_forward.2} parent=5 // pred_check_branch
      %102 = sbr.rel (%p100) target = $region20
    $region19: #{patch_merging_forward.2} parent=5 // pred_region
      // Predicated region
      $region21: #{patch_merging_forward.2} parent=19 // pred_check
        %p103 = pneg %p28
      $region22: #{patch_merging_forward.2} parent=19 // pred_check_branch
        %105 = sbr.rel (%p103) target = $region24
      $region23: #{patch_merging_forward.2} parent=19 // pred_region
        %s106 = smul.u32 8, %s8
        %p107 = scmp.lt.s32.totalorder %s106, 15
        %s108 = scalar_select %p107, %s106, 15
        %s109 = smul.addr %s108, 4
        %s110 = scalar_lea.vmem %s0, %s109
        %s111 = smul.u32 8, %s8
      $region24: #{patch_merging_forward.2} parent=19 // pred_fallthru
        _
    $region20: #{patch_merging_forward.2} parent=5 // pred_fallthru
      _
    %p112 = scmp.le.s32.totalorder 1, %s8
    %p113 = scmp.lt.s32.totalorder %s8, 3
    %p114 = pnand %p112, %p113
    %p115 = pneg %p114
    // Predicated region
    $region25: #{patch_merging_forward.2} parent=5 // pred_check
      _
    $region26: #{patch_merging_forward.2} parent=5 // pred_check_branch
      %117 = sbr.rel (%p114) target = $region28
    $region27: #{patch_merging_forward.2} parent=5 // pred_region
      %s118 = ssub.s32 %s8, 1
      %s119 = smul.u32 8, %s13
      %p120 = scmp.lt.s32.totalorder %s119, 15
      %s121 = scalar_select %p120, %s119, 15
      %s122 = smul.addr %s121, 4
      %s123 = scalar_lea.vmem %s0, %s122
      %p124 = pneg %p34
      %p125 = pneg %p31
      %p126 = pneg %p55
      %p127 = pneg %p52
      %p128 = pneg %p81
      %p129 = pneg %p78
      %p130 = scmp.lt.s32.totalorder %s13, 1
      %s131 = scalar_select %p130, %s13, 1
      %s132 = smul.addr %s131, 2
      %s133 = scalar_lea.vmem %s2, %s132
      %s134 = smul.u32 8, %s13
      %p135 = scmp.lt.s32.totalorder %s134, 15
      %s136 = scalar_select %p135, %s134, 15
      %s137 = smul.addr %s136, 4
      %s138 = scalar_lea.vmem %s0, %s137
      %s139 = smul.u32 8, %s13
      %p140 = scmp.lt.s32.totalorder %s13, 1
      %s141 = scalar_select %p140, %s13, 1
      %s142 = smul.addr %s141, 2
      %s143 = scalar_lea.vmem %s2, %s142
      %v145 = vld [vmem:[%s138] sm:$0xf]
      %v146 = vld [vmem:[%s138 + $0x4] sm:$0xf]
      %v147 = vld [vmem:[%s138 + $0x8] sm:$0xf]
      %v148 = vld [vmem:[%s138 + $0xc] sm:$0xf]
      %v149 = vld [vmem:[%s138 + $0x10] sm:$0xf]
      %v150 = vld [vmem:[%s138 + $0x14] sm:$0xf]
      %v151 = vld [vmem:[%s138 + $0x18] sm:$0xf]
      %v152 = vld [vmem:[%s138 + $0x1c] sm:$0xf]
      %v153 = vld [vmem:[%s1] sm:$0xf]
      %v154 = vld [vmem:[%s1 + $0x4] sm:$0xf]
      %v163 = vunpack.c.l.b16 %v145
      %v164 = vunpack.c.l.b16 %v146
      %v165 = vunpack.c.l.b16 %v147
      %v166 = vunpack.c.l.b16 %v148
      %v167 = vunpack.c.l.b16 %v149
      %v168 = vunpack.c.l.b16 %v150
      %v169 = vunpack.c.l.b16 %v151
      %v170 = vunpack.c.l.b16 %v152
      %v171 = vpack.c.b16 %v164, %v163
      %v172 = vpack.c.b16 %v166, %v165
      %v173 = vpack.c.b16 %v168, %v167
      %v174 = vpack.c.b16 %v170, %v169
      %v177 = vunpack.c.l.b16 %v153
      %v178 = vunpack.c.l.b16 %v154
      %v179 = vpack.c.b16 %v178, %v177
      %vm181 = vcmask 130048
      %v183 = vsel %vm181, %v171, 0
      %v186 = vsel %vm181, %v172, 0
      %v189 = vsel %vm181, %v173, 0
      %v192 = vsel %vm181, %v174, 0
      %194 = vmatpush.bf16.msra.mxu0 0
      %195 = vmatpush.bf16.msra.mxu0 0
      %196 = vmatpush.bf16.msra.mxu0 0
      %197 = vmatpush.bf16.msra.mxu0 0
      %198 = vmatpush.bf16.msra.mxu0 0
      %199 = vmatpush.bf16.msra.mxu0 0
      %200 = vmatpush.bf16.msra.mxu0 0
      %201 = vmatpush.bf16.msra.mxu0 %v179
      %202 = vmatmul.bf16.gmra.mxu0 %v183
      %v203 = vpop.f32.mrf.mxu0
      %v204 = vadd.f32 0.0, %v203
      %v205 = vpop.f32.mrf.mxu0
      %v206 = vadd.f32 0.0, %v205
      %207 = vmatmul.bf16.gmra.mxu0 %v186
      %v208 = vpop.f32.mrf.mxu0
      %v209 = vadd.f32 0.0, %v208
      %v210 = vpop.f32.mrf.mxu0
      %v211 = vadd.f32 0.0, %v210
      %212 = vmatmul.bf16.gmra.mxu0 %v189
      %v213 = vpop.f32.mrf.mxu0
      %v214 = vadd.f32 0.0, %v213
      %v215 = vpop.f32.mrf.mxu0
      %v216 = vadd.f32 0.0, %v215
      %217 = vmatmul.bf16.gmra.mxu0 %v192
      %v218 = vpop.f32.mrf.mxu0
      %v219 = vadd.f32 0.0, %v218
      %v220 = vpop.f32.mrf.mxu0
      %v221 = vadd.f32 0.0, %v220
      %222 = vdwg.mxu0
      %v223 = vadd.f32 %v204, %v206
      %v224 = vadd.f32 %v223, %v209
      %v225 = vadd.f32 %v224, %v211
      %v226 = vadd.f32 %v225, %v214
      %v227 = vadd.f32 %v226, %v216
      %v228 = vadd.f32 %v227, %v219
      %v229 = vadd.f32 %v228, %v221
      %v230 = vrot.slane %v229, 4
      %v231 = vadd.f32 %v229, %v230
      %v232 = vrot.slane %v231, 2
      %v233 = vadd.f32 %v231, %v232
      %v234 = vrot.slane %v233, 1
      %v235 = vadd.f32 %v233, %v234
      %236 = vst [vmem:[%s143] sm:$0x1] %v235
      %v237 = vmul.f32 %v204, %v204
      %v238 = vmul.f32 %v206, %v206
      %v239 = vmul.f32 %v209, %v209
      %v240 = vmul.f32 %v211, %v211
      %v241 = vmul.f32 %v214, %v214
      %v242 = vmul.f32 %v216, %v216
      %v243 = vmul.f32 %v219, %v219
      %v244 = vmul.f32 %v221, %v221
      %v245 = vadd.f32 %v237, %v238
      %v246 = vadd.f32 %v245, %v239
      %v247 = vadd.f32 %v246, %v240
      %v248 = vadd.f32 %v247, %v241
      %v249 = vadd.f32 %v248, %v242
      %v250 = vadd.f32 %v249, %v243
      %v251 = vadd.f32 %v250, %v244
      %v252 = vrot.slane %v251, 4
      %v253 = vadd.f32 %v251, %v252
      %v254 = vrot.slane %v253, 2
      %v255 = vadd.f32 %v253, %v254
      %v256 = vrot.slane %v255, 1
      %v257 = vadd.f32 %v255, %v256
      %258 = vst [vmem:[%s143 + $0x1] sm:$0x1] %v257
      %p259 = scmp.lt.s32.totalorder %s13, 1
      %s260 = scalar_select %p259, %s13, 1
      %s261 = smul.addr %s260, 2
      %s262 = scalar_lea.vmem %s2, %s261
      // Predicated region
      $region29: #{patch_merging_forward.2} parent=27 // pred_check
        %p263 = pneg %p78
      $region30: #{patch_merging_forward.2} parent=27 // pred_check_branch
        %265 = sbr.rel (%p263) target = $region32
      $region31: #{patch_merging_forward.2} parent=27 // pred_region
        _
      $region32: #{patch_merging_forward.2} parent=27 // pred_fallthru
        _
    $region28: #{patch_merging_forward.2} parent=5 // pred_fallthru
      _
    %p266 = scmp.le.s32.totalorder 2, %s8
    // Predicated region
    $region33: #{patch_merging_forward.2} parent=5 // pred_check
      %p267 = pneg %p266
    $region34: #{patch_merging_forward.2} parent=5 // pred_check_branch
      %269 = sbr.rel (%p267) target = $region36
    $region35: #{patch_merging_forward.2} parent=5 // pred_region
      %s270 = ssub.s32 %s8, 2
      // Predicated region
      $region37: #{patch_merging_forward.2} parent=35 // pred_check
        %p271 = pneg %p84
      $region38: #{patch_merging_forward.2} parent=35 // pred_check_branch
        %273 = sbr.rel (%p271) target = $region40
      $region39: #{patch_merging_forward.2} parent=35 // pred_region
        %p274 = scmp.lt.s32.totalorder %s14, 1
        %s275 = scalar_select %p274, %s14, 1
        %s276 = smul.addr %s275, 2
        %s277 = scalar_lea.vmem %s2, %s276
      $region40: #{patch_merging_forward.2} parent=35 // pred_fallthru
        _
    $region36: #{patch_merging_forward.2} parent=5 // pred_fallthru
      _
  $region6: #{patch_merging_forward.2} parent=0 // loop_footer
    %s12 = sadd.s32 1, %s8
  $region7: #{patch_merging_forward.2} parent=0 // loop_footer_branch
    %7 = sbr.rel target = $region3
  $region8: #{patch_merging_forward.2} parent=0 // loop_exit
    _

</llo_original>
